<compile_context>
chip_gen: v7x
topology: tpu7x:2x2x1
jax: 0.10.0
libtpu: 0.0.40
codegen_flags: <defaults>
</compile_context>

<pallas_src>
import functools
import math

import jax
import jax.numpy as jnp
from jax.experimental import pallas as pl
from jax.experimental.pallas import tpu as pltpu

LANES = 128


def _num_tensorcores():
    """Best-effort TensorCores-per-device count (2 on v7x, else 1)."""
    try:
        info = pltpu.get_tpu_info()
    except Exception:
        info = None
    if info is not None:
        for name in ("num_cores", "core_count", "num_tensorcores",
                     "tensor_core_count", "num_tensor_cores"):
            v = getattr(info, name, None)
            if isinstance(v, int) and v >= 1:
                return v
    return 1


def _rmse_partial_kernel(p_ref, t_ref, o_ref, *, tile_rows, acc_rows,
                         tiles_per_split, rows_total, needs_mask):
    i = pl.program_id(0)   # TensorCore split (CORE_PARALLEL on multi-TC chips)
    j = pl.program_id(1)   # streaming reduction axis ("arbitrary")

    # The output block is resident across the whole j loop -> use it as a wide
    # (acc_rows, 128) f32 vector accumulator.  Initialize on the first step.
    @pl.when(j == 0)
    def _():
        o_ref[...] = jnp.zeros_like(o_ref)

    d = p_ref[...].astype(jnp.float32) - t_ref[...].astype(jnp.float32)
    sq = d * d

    folds = tile_rows // acc_rows

    def accumulate(x):
        # (tile_rows,128) -> (acc_rows,128): acc_rows/8 independent vreg add
        # chains of length folds on the VPU only (no XLU cross-lane work).
        o_ref[...] += jnp.sum(x.reshape(folds, acc_rows, LANES), axis=0)

    if needs_mask:
        tile_idx = i * tiles_per_split + j
        num_full_tiles = rows_total // tile_rows  # tiles with no invalid rows

        @pl.when(tile_idx < num_full_tiles)
        def _():
            accumulate(sq)

        @pl.when(tile_idx >= num_full_tiles)
        def _():
            # Row-level mask: zero rows beyond the real row count (partial
            # trailing block and/or clamped duplicate tile on a split).
            # Max index is rows_total = n/128, so no int32 overflow.
            base = tile_idx * tile_rows
            row_ids = jax.lax.broadcasted_iota(
                jnp.int32, (tile_rows, LANES), 0)
            accumulate(jnp.where(base + row_ids < rows_total, sq, 0.0))
    else:
        accumulate(sq)


def rmse_loss(predicted, target, *, tile_rows=4096):
    """RMSE(predicted, target) = sqrt(mean((predicted - target)**2))."""
    assert predicted.shape == target.shape, (
        "predicted/target must match (no broadcasting in MSELoss default)")
    n = predicted.size

    out_dtype = jnp.result_type(predicted.dtype, target.dtype)
    if not jnp.issubdtype(out_dtype, jnp.floating):
        out_dtype = jnp.float32

    if n == 0:
        return jnp.float32(jnp.nan).astype(out_dtype)  # torch mean(empty)=nan

    def _prep(x):
        x = jnp.ravel(x)
        # TODO(synk): float64 / integer inputs are streamed as float32; exact
        # f64 RMSE parity is not provided (TPU-native dtypes only).
        if (not jnp.issubdtype(x.dtype, jnp.floating)) or x.dtype.itemsize > 4:
            x = x.astype(jnp.float32)
        return x

    p_flat = _prep(predicted)
    t_flat = _prep(target)

    # Lane-dense view: rows of 128 lanes.  The sub-row remainder (< 128
    # elements) is handled with plain jnp below; the common lane-aligned case
    # has ZERO wrapper-side copies.
    rows_total = n // LANES
    tail_n = n - rows_total * LANES

    # Sublane multiple required by the narrower streamed dtype:
    # 8 (4-byte) / 16 (2-byte) / 32 (1-byte).
    min_itemsize = min(p_flat.dtype.itemsize, t_flat.dtype.itemsize)
    sub = 8 * (4 // min_itemsize)

    if rows_total < sub:
        # Too small to fill one aligned tile: trivial jnp fallback (< 4 KiB).
        d = p_flat.astype(jnp.float32) - t_flat.astype(jnp.float32)
        return jnp.sqrt(jnp.sum(d * d) / n).astype(out_dtype)

    tail_sum = jnp.float32(0.0)
    if tail_n:
        # Cold path: <128-element fixup in plain jnp (the prefix slice below
        # only materializes when n is not lane-aligned).
        dp = (p_flat[rows_total * LANES:].astype(jnp.float32)
              - t_flat[rows_total * LANES:].astype(jnp.float32))
        tail_sum = jnp.sum(dp * dp)
        p_flat = p_flat[: rows_total * LANES]
        t_flat = t_flat[: rows_total * LANES]

    p2 = p_flat.reshape(rows_total, LANES)
    t2 = t_flat.reshape(rows_total, LANES)

    # --- Tile sizing --------------------------------------------------------
    # Default 4096 rows (2 MiB/input f32 per buffer -> 8 MiB double-buffered),
    # within the scoped-VMEM default of every chip (16 MiB v5e, 32 MiB
    # v6e/v7x).  Cap so 2 inputs x 2 buffers stay under ~12 MiB for any dtype.
    bytes_per_row = LANES * (p_flat.dtype.itemsize + t_flat.dtype.itemsize)
    vmem_budget = 12 * 1024 * 1024
    cap_rows = max(sub, (vmem_budget // (2 * bytes_per_row)) // sub * sub)
    tr = min(tile_rows, rows_total, cap_rows)
    tr = max(sub, (tr // sub) * sub)

    # Wide accumulator (up to 64 rows) -> several independent add chains
    # per tile instead of one tr/8-long serial chain.
    acc_rows = math.gcd(tr, 64)

    num_tiles = pl.cdiv(rows_total, tr)

    # Shard the tile stream across TensorCores only where that exists (v7x:
    # 2 TCs/chip).  On single-TC chips keep one split so the hot loop stays
    # mask-free whenever rows_total % tr == 0.
    num_cores = min(_num_tensorcores(), 2)
    num_splits = num_cores if (num_cores > 1 and num_tiles >= num_cores) else 1
    tiles_per_split = pl.cdiv(num_tiles, num_splits)

    # Mask compiled in only if some grid step can see rows beyond rows_total
    # (partial trailing tile and/or clamped duplicate tiles on a split).
    needs_mask = (num_splits * tiles_per_split * tr) != rows_total

    def in_map(i, j):
        # Clamp so out-of-range grid points re-read the last valid tile; their
        # contribution is zeroed by the in-kernel row mask.
        return (jnp.minimum(i * tiles_per_split + j, num_tiles - 1), 0)

    kernel = functools.partial(
        _rmse_partial_kernel, tile_rows=tr, acc_rows=acc_rows,
        tiles_per_split=tiles_per_split, rows_total=rows_total,
        needs_mask=needs_mask)

    if num_splits > 1:
        dim_sem = (pltpu.CORE_PARALLEL, pltpu.ARBITRARY)
    else:
        dim_sem = ("arbitrary", "arbitrary")

    partials = pl.pallas_call(
        kernel,
        out_shape=jax.ShapeDtypeStruct((num_splits, acc_rows, LANES),
                                       jnp.float32),
        grid_spec=pltpu.PrefetchScalarGridSpec(
            num_scalar_prefetch=0,
            grid=(num_splits, tiles_per_split),
            in_specs=[
                pl.BlockSpec((tr, LANES), in_map),
                pl.BlockSpec((tr, LANES), in_map),
            ],
            out_specs=pl.BlockSpec((None, acc_rows, LANES),
                                   lambda i, j: (i, 0, 0)),
        ),
        compiler_params=pltpu.CompilerParams(dimension_semantics=dim_sem),
        cost_estimate=pl.CostEstimate(
            flops=3 * n, transcendentals=0,
            bytes_accessed=p2.nbytes + t2.nbytes
            + num_splits * acc_rows * LANES * 4),
    )(p2, t2)

    # Final cross-lane/sublane reduce + sqrt: a few KiB, once, in the wrapper.
    total = jnp.sum(partials, dtype=jnp.float32) + tail_sum
    return jnp.sqrt(total / n).astype(out_dtype)


if __name__ == "__main__":
    key = jax.random.PRNGKey(0)
    k1, k2 = jax.random.split(key)
    # Small shapes consistent with a generic regression loss: (2, 4, 16, 16).
    predicted = jax.random.normal(k1, (2, 4, 16, 16), dtype=jnp.float32)
    target = jax.random.normal(k2, (2, 4, 16, 16), dtype=jnp.float32)

    rmse = rmse_loss(predicted, target)
    jax.block_until_ready(rmse)
    ref = jnp.sqrt(jnp.mean((predicted - target) ** 2))
    assert jnp.allclose(rmse, ref, rtol=1e-5, atol=1e-5), (rmse, ref)

    # Multi-tile streaming path (small tile to force several grid steps).
    k3, k4 = jax.random.split(k1)
    p_b = jax.random.normal(k3, (3, 8, 128), dtype=jnp.float32)
    t_b = jax.random.normal(k4, (3, 8, 128), dtype=jnp.float32)
    rmse_b = rmse_loss(p_b, t_b, tile_rows=8)
    jax.block_until_ready(rmse_b)
    ref_b = jnp.sqrt(jnp.mean((p_b - t_b) ** 2))
    assert jnp.allclose(rmse_b, ref_b, rtol=1e-5, atol=1e-5), (rmse_b, ref_b)

    # Ragged path: non-lane-aligned element count (partial trailing tile with
    # the row mask + jnp sub-row tail fixup).
    k5, k6 = jax.random.split(k2)
    p_c = jax.random.normal(k5, (3, 5, 97), dtype=jnp.float32)
    t_c = jax.random.normal(k6, (3, 5, 97), dtype=jnp.float32)
    rmse_c = rmse_loss(p_c, t_c)
    jax.block_until_ready(rmse_c)
    ref_c = jnp.sqrt(jnp.mean((p_c - t_c) ** 2))
    assert jnp.allclose(rmse_c, ref_c, rtol=1e-5, atol=1e-5), (rmse_c, ref_c)

    # Mixed-dtype path: target streamed natively as bf16 (no wrapper astype).
    k7, k8 = jax.random.split(k3)
    p_d = jax.random.normal(k7, (4, 16, 128), dtype=jnp.float32)
    t_d = jax.random.normal(k8, (4, 16, 128), dtype=jnp.bfloat16)
    rmse_d = rmse_loss(p_d, t_d)
    jax.block_until_ready(rmse_d)
    ref_d = jnp.sqrt(jnp.mean((p_d - t_d.astype(jnp.float32)) ** 2))
    assert jnp.allclose(rmse_d, ref_d, rtol=1e-5, atol=1e-5), (rmse_d, ref_d)

    print("KERNEL_OK")
</pallas_src>

<mosaic_0001>
module attributes {stable_mosaic.version = 11 : i64} {
  func.func @_rmse_partial_kernel(%arg0: i32, %arg1: i32, %arg2: memref<16x128xf32, #tpu.memory_space<vmem>>, %arg3: memref<16x128xf32, #tpu.memory_space<vmem>>, %arg4: memref<1x16x128xf32, #tpu.memory_space<vmem>>) attributes {dimension_semantics = [#tpu.dimension_semantics<arbitrary>, #tpu.dimension_semantics<arbitrary>], iteration_bounds = array<i64: 1, 1>, scalar_prefetch = 0 : i64, scratch_operands = 0 : i64, tpu.core_type = #tpu.core_type<tc>, window_params = [{transform_indices = @transform_0, window_bounds = array<i64: 16, 128>}, {transform_indices = @transform_1, window_bounds = array<i64: 16, 128>}, {transform_indices = @transform_2, window_bounds = array<i64: 1, 16, 128>}]} {
    %c0_i32 = arith.constant 0 : i32
    %0 = arith.cmpi eq, %arg1, %c0_i32 : i32
    %1 = arith.extui %0 : i1 to i32
    %c0_i32_0 = arith.constant 0 : i32
    %2 = arith.cmpi ne, %1, %c0_i32_0 : i32
    scf.if %2 {
      %cst_10 = arith.constant 0.000000e+00 : f32
      %15 = vector.broadcast %cst_10 : f32 to vector<16x128xf32>
      %c0_11 = arith.constant 0 : index
      %c0_12 = arith.constant 0 : index
      %c0_13 = arith.constant 0 : index
      %16 = vector.load %arg4[%c0_11, %c0_12, %c0_13] : memref<1x16x128xf32, #tpu.memory_space<vmem>>, vector<1x16x128xf32>
      %17 = vector.shape_cast %16 : vector<1x16x128xf32> to vector<16x128xf32>
      %18 = vector.shape_cast %15 : vector<16x128xf32> to vector<1x16x128xf32>
      tpu.vector_store %arg4[%c0_11, %c0_12, %c0_13], %18 {strides = array<i32>} : memref<1x16x128xf32, #tpu.memory_space<vmem>>, vector<1x16x128xf32>,
    } else {
    }
    %c0 = arith.constant 0 : index
    %c0_1 = arith.constant 0 : index
    %3 = vector.load %arg2[%c0, %c0_1] : memref<16x128xf32, #tpu.memory_space<vmem>>, vector<16x128xf32>
    %c0_2 = arith.constant 0 : index
    %c0_3 = arith.constant 0 : index
    %4 = vector.load %arg3[%c0_2, %c0_3] : memref<16x128xf32, #tpu.memory_space<vmem>>, vector<16x128xf32>
    %5 = arith.subf %3, %4 : vector<16x128xf32>
    %6 = arith.mulf %5, %5 : vector<16x128xf32>
    %c0_4 = arith.constant 0 : index
    %c0_5 = arith.constant 0 : index
    %c0_6 = arith.constant 0 : index
    %7 = vector.load %arg4[%c0_4, %c0_5, %c0_6] : memref<1x16x128xf32, #tpu.memory_space<vmem>>, vector<1x16x128xf32>
    %8 = vector.shape_cast %7 : vector<1x16x128xf32> to vector<16x128xf32>
    %9 = vector.shape_cast %6 : vector<16x128xf32> to vector<1x16x128xf32>
    %cst = arith.constant dense<0.000000e+00> : vector<16x128xf32>
    %10 = vector.multi_reduction <add>, %9, %cst [0] : vector<1x16x128xf32> to vector<16x128xf32>
    %11 = arith.addf %8, %10 : vector<16x128xf32>
    %c0_7 = arith.constant 0 : index
    %c0_8 = arith.constant 0 : index
    %c0_9 = arith.constant 0 : index
    %12 = vector.load %arg4[%c0_7, %c0_8, %c0_9] : memref<1x16x128xf32, #tpu.memory_space<vmem>>, vector<1x16x128xf32>
    %13 = vector.shape_cast %12 : vector<1x16x128xf32> to vector<16x128xf32>
    %14 = vector.shape_cast %11 : vector<16x128xf32> to vector<1x16x128xf32>
    tpu.vector_store %arg4[%c0_7, %c0_8, %c0_9], %14 {strides = array<i32>} : memref<1x16x128xf32, #tpu.memory_space<vmem>>, vector<1x16x128xf32>,
    return
  }
  func.func @transform_0(%arg0: i32, %arg1: i32) -> (i32, i32) {
    %c1_i32 = arith.constant 1 : i32
    %0 = arith.muli %arg0, %c1_i32 : i32
    %1 = arith.addi %0, %arg1 : i32
    %c0_i32 = arith.constant 0 : i32
    %2 = arith.minsi %1, %c0_i32 : i32
    %c0_i32_0 = arith.constant 0 : i32
    %c0_i32_1 = arith.constant 0 : i32
    return %2, %c0_i32_0 : i32, i32
  }
  func.func @transform_1(%arg0: i32, %arg1: i32) -> (i32, i32) {
    %c1_i32 = arith.constant 1 : i32
    %0 = arith.muli %arg0, %c1_i32 : i32
    %1 = arith.addi %0, %arg1 : i32
    %c0_i32 = arith.constant 0 : i32
    %2 = arith.minsi %1, %c0_i32 : i32
    %c0_i32_0 = arith.constant 0 : i32
    %c0_i32_1 = arith.constant 0 : i32
    return %2, %c0_i32_0 : i32, i32
  }
  func.func @transform_2(%arg0: i32, %arg1: i32) -> (i32, i32, i32) {
    %c0_i32 = arith.constant 0 : i32
    %c0_i32_0 = arith.constant 0 : i32
    %c0_i32_1 = arith.constant 0 : i32
    return %arg0, %c0_i32, %c0_i32_0 : i32, i32, i32
  }
}

</mosaic_0001>

<llo_original>
// kernel: tpu_custom_call.1
$region0: #{tpu_custom_call.1}
  #allocation0 [shape = 'u32[]', space=smem, size = 0x4, offset = 0x4, fixed_abs, tag = 'smem constant byte address 0x4 - core index']
  #allocation1 [shape = 'u32[144,128]{1,0:T(1,128)}', space=vmem, size = 0x12000, scoped, tag = 'internal scratch']
  %s0 = inlined_call_operand.hbm [shape: f32[16,128], index: 0, kind: input, shape index: {}]
  %s1 = inlined_call_operand.hbm [shape: f32[16,128], index: 1, kind: input, shape index: {}]
  %s2 = inlined_call_operand.hbm [shape: f32[1,16,128], index: 2, kind: output, shape index: {}]
  %s3 = sld [smem:[#allocation0]]
  $region30: #{tpu_custom_call.1} parent=0
    _
  %s5 = ssub.s32 1, %s3
  %s6 = scalar_select 0, %s5, %s3
  $region1: #{tpu_custom_call.1} parent=0
    #allocation2 [shape = 'u8[8192]{0}', space=vmem, size = 0x2000, scoped, tag = 'input window, operand 0, single buffered']
    #allocation3 [shape = 's32[1]{0}', space=sflag, size = 0x4, scoped, tag = 'scoped memory for tpu_custom_call.1']
    #allocation4 [shape = 's32[1]{0}', space=sflag, size = 0x4, scoped, tag = 'scoped memory for tpu_custom_call.1']
    #allocation5 [shape = 'u8[8192]{0}', space=vmem, size = 0x2000, scoped, tag = 'input window, operand 1, single buffered']
    #allocation6 [shape = 's32[1]{0}', space=sflag, size = 0x4, scoped, tag = 'scoped memory for tpu_custom_call.1']
    #allocation7 [shape = 'u8[8192]{0}', space=vmem, size = 0x2000, scoped, tag = 'output window, operand 0, single buffered']
    %7 = vsyncpa [#allocation3], 0
    %8 = vsyncpa [#allocation6], 0
    %9 = vsyncpa [#allocation4], 0
    // Predicated region
    $region2: #{tpu_custom_call.1} parent=1 // pred_check
      _
    $region3: #{tpu_custom_call.1} parent=1 // pred_check_branch
      %11 = sbr.rel (0) target = $region5
    $region4: #{tpu_custom_call.1} parent=1 // pred_region
      %s12 = sadd.s32 0, 0
      %p13 = scmp.lt.s32.totalorder %s12, 0
      %s14 = scalar_select %p13, %s12, 0
      %s15 = smul.u32 2, %s14
      %s17 = ssub.s32 256, 256
      %18 = vsyncadd [#allocation3], %s17
      %s19 = smul.addr %s15, 128
      %s20 = scalar_lea.hbm %s0, %s19
      %s21 = sshll.u32 [#allocation2], 4
      %s22 = int_to_ptr.vmem [resolvable:$true] %s21
      %27 = dma.hbm_to_vmem [thread:$0]  %s20, 256, %s22, [#allocation3], 128, 128, 8
    $region5: #{tpu_custom_call.1} parent=1 // pred_fallthru
      _
    // Predicated region
    $region6: #{tpu_custom_call.1} parent=1 // pred_check
      _
    $region7: #{tpu_custom_call.1} parent=1 // pred_check_branch
      %29 = sbr.rel (0) target = $region9
    $region8: #{tpu_custom_call.1} parent=1 // pred_region
      %s30 = sadd.s32 0, 0
      %p31 = scmp.lt.s32.totalorder %s30, 0
      %s32 = scalar_select %p31, %s30, 0
      %s33 = smul.u32 2, %s32
      %s35 = ssub.s32 256, 256
      %36 = vsyncadd [#allocation6], %s35
      %s37 = smul.addr %s33, 128
      %s38 = scalar_lea.hbm %s1, %s37
      %s39 = sshll.u32 [#allocation5], 4
      %s40 = int_to_ptr.vmem [resolvable:$true] %s39
      %45 = dma.hbm_to_vmem [thread:$0]  %s38, 256, %s40, [#allocation6], 128, 128, 8
    $region9: #{tpu_custom_call.1} parent=1 // pred_fallthru
      _
    // Predicated region
    $region10: #{tpu_custom_call.1} parent=1 // pred_check
      _
    $region11: #{tpu_custom_call.1} parent=1 // pred_check_branch
      %47 = sbr.rel (0) target = $region13
    $region12: #{tpu_custom_call.1} parent=1 // pred_region
      %48 = dma.done [#allocation3], 256
    $region13: #{tpu_custom_call.1} parent=1 // pred_fallthru
      _
    // Predicated region
    $region14: #{tpu_custom_call.1} parent=1 // pred_check
      _
    $region15: #{tpu_custom_call.1} parent=1 // pred_check_branch
      %50 = sbr.rel (0) target = $region17
    $region16: #{tpu_custom_call.1} parent=1 // pred_region
      %51 = dma.done [#allocation6], 256
    $region17: #{tpu_custom_call.1} parent=1 // pred_fallthru
      _
    %s52 = sadd.s32 0, 0
    %p53 = scmp.lt.s32.totalorder %s52, 0
    %s54 = scalar_select %p53, %s52, 0
    %s55 = smul.u32 2, %s54
    %s56 = sadd.s32 0, 0
    %p57 = scmp.lt.s32.totalorder %s56, 0
    %s58 = scalar_select %p57, %s56, 0
    %s59 = smul.u32 2, %s58
    %p60 = scmp.eq.s32.totalorder 0, 0
    // Predicated region
    $region18: #{tpu_custom_call.1} parent=1 // pred_check
      %p61 = pneg %p60
    $region19: #{tpu_custom_call.1} parent=1 // pred_check_branch
      %63 = sbr.rel (%p61) target = $region21
    $region20: #{tpu_custom_call.1} parent=1 // pred_region
      %64 = vst [vmem:[#allocation7] sm:$0xff] 0.0
      %65 = vst [vmem:[#allocation7 + $0x8] sm:$0xff] 0.0
    $region21: #{tpu_custom_call.1} parent=1 // pred_fallthru
      _
    %v66 = vld [vmem:[#allocation2] sm:$0xff]
    %v67 = vld [vmem:[#allocation2 + $0x8] sm:$0xff]
    %v68 = vld [vmem:[#allocation5] sm:$0xff]
    %v69 = vld [vmem:[#allocation5 + $0x8] sm:$0xff]
    %v70 = vsub.f32 %v66, %v68
    %v71 = vsub.f32 %v67, %v69
    %v72 = vmul.f32 %v70, %v70
    %v73 = vmul.f32 %v71, %v71
    %v74 = vld [vmem:[#allocation7] sm:$0xff]
    %v75 = vld [vmem:[#allocation7 + $0x8] sm:$0xff]
    %v76 = vadd.f32 %v72, 0.0
    %v77 = vadd.f32 %v73, 0.0
    %v78 = vadd.f32 %v74, %v76
    %v79 = vadd.f32 %v75, %v77
    %80 = vst [vmem:[#allocation7] sm:$0xff] %v78
    %81 = vst [vmem:[#allocation7 + $0x8] sm:$0xff] %v79
    // Predicated region
    $region22: #{tpu_custom_call.1} parent=1 // pred_check
      _
    $region23: #{tpu_custom_call.1} parent=1 // pred_check_branch
      %83 = sbr.rel (0) target = $region25
    $region24: #{tpu_custom_call.1} parent=1 // pred_region
      %s85 = ssub.s32 256, 256
      %86 = vsyncadd [#allocation4], %s85
      %s87 = sshll.u32 [#allocation7], 4
      %s88 = int_to_ptr.vmem [resolvable:$true] %s87
      %93 = dma.vmem_to_hbm [thread:$0]  %s88, 256, %s2, [#allocation4], 128, 128, 8
    $region25: #{tpu_custom_call.1} parent=1 // pred_fallthru
      _
    // Predicated region
    $region26: #{tpu_custom_call.1} parent=1 // pred_check
      _
    $region27: #{tpu_custom_call.1} parent=1 // pred_check_branch
      %95 = sbr.rel (0) target = $region29
    $region28: #{tpu_custom_call.1} parent=1 // pred_region
      %96 = dma.done [#allocation4], 256
    $region29: #{tpu_custom_call.1} parent=1 // pred_fallthru
      _
    %97 = vsyncpa [#allocation3], 1
    %98 = vsyncpa [#allocation6], 1
    %99 = vsyncpa [#allocation4], 1

</llo_original>
